<compile_context>
chip_gen: v7x
topology: tpu7x:2x2x1
jax: 0.10.0
libtpu: 0.0.40
codegen_flags: <defaults>
</compile_context>

<pallas_src>
import math
import functools

import jax
import jax.numpy as jnp
from jax.experimental import pallas as pl
from jax.experimental.pallas import tpu as pltpu


# ---------------------------------------------------------------------------
# Parameter ("buffer") construction — deterministic, mirrors __init__ exactly.
# ---------------------------------------------------------------------------
def make_positional_encoding_table(d_model: int, max_len: int = 5000) -> jnp.ndarray:
    position = jnp.arange(max_len, dtype=jnp.float32)[:, None]                  # (L, 1)
    div_term = jnp.exp(
        jnp.arange(0, d_model, 2, dtype=jnp.float32) * (-math.log(10000.0) / d_model)
    )                                                                           # (D/2,)
    pe = jnp.zeros((max_len, 1, d_model), dtype=jnp.float32)
    pe = pe.at[:, 0, 0::2].set(jnp.sin(position * div_term))
    pe = pe.at[:, 0, 1::2].set(jnp.cos(position * div_term))
    return pe


# ---------------------------------------------------------------------------
# Kernels (operate on the lane-dense 2-D (tS, B*D) view)
# ---------------------------------------------------------------------------
def _pe_add_kernel(x_ref, pe_ref, o_ref, *, batch):
    # x_ref: (tS, B*D), pe_ref: (tS, D) -> tile pe across the batch groups.
    pe_b = jnp.tile(pe_ref[...], (1, batch)) if batch > 1 else pe_ref[...]
    o_ref[...] = (x_ref[...] + pe_b).astype(o_ref.dtype)


def _pe_add_dropout_kernel(x_ref, pe_ref, bits_ref, o_ref, *, batch, threshold, scale):
    # Inverted dropout: keep with prob (1-p), scale kept values by 1/(1-p).
    # Raw uint32 threshold compare (no float conversion of the random bits).
    pe_b = jnp.tile(pe_ref[...], (1, batch)) if batch > 1 else pe_ref[...]
    y = x_ref[...] + pe_b
    keep = bits_ref[...] >= jnp.uint32(threshold)          # P(keep) = 1 - p
    o_ref[...] = jnp.where(keep, y * jnp.float32(scale), 0.0).astype(o_ref.dtype)


# ---------------------------------------------------------------------------
# Wrapper
# ---------------------------------------------------------------------------
def _choose_seq_tile(seq_len: int, row_bytes: int, target_tile_bytes: int) -> int:
    """Rows per tile: multiple of 8, ~target_tile_bytes per buffer, capped at S."""
    rows = max(8, (target_tile_bytes // max(row_bytes, 1)) // 8 * 8)
    return int(min(rows, seq_len))


def positional_encoding_forward(
    x,
    pe,
    *,
    dropout_p: float = 0.1,
    training: bool = False,
    rng_key=None,
    donate_x: bool = False,          # set True to alias output onto x's HBM buffer
    target_tile_bytes: int = 2 << 20,
):
    """x: (S, B, D); pe: (max_len, 1, D). Returns (S, B, D)."""
    S, B, D = x.shape
    BD = B * D

    x2d = x.reshape(S, BD)           # contiguous reshape: free layout plumbing
    pe2d = pe[:S, 0, :]              # (S, D) — small, streamed separately

    row_bytes = BD * x.dtype.itemsize
    tS = _choose_seq_tile(S, row_bytes, target_tile_bytes)
    grid = (pl.cdiv(S, tS),)

    x_spec = pl.BlockSpec((tS, BD), lambda i: (i, 0))
    pe_spec = pl.BlockSpec((tS, D), lambda i: (i, 0))
    o_spec = pl.BlockSpec((tS, BD), lambda i: (i, 0))

    use_dropout = training and dropout_p > 0.0
    if use_dropout and dropout_p >= 1.0:
        return jnp.zeros_like(x)

    # VMEM budget: double-buffered big tiles (x, out, [bits]) + pe tiles + slack.
    n_big = 3 if use_dropout else 2
    tile_bytes = tS * BD * x.dtype.itemsize
    pe_tile_bytes = tS * D * 4
    vmem_limit = 2 * (n_big * tile_bytes + pe_tile_bytes) + (2 << 20)
    vmem_limit = int(min(max(vmem_limit, 4 << 20), 96 << 20))

    cparams = pltpu.CompilerParams(
        dimension_semantics=("parallel",),   # shard S-tiles across v7x's 2 TCs
        vmem_limit_bytes=vmem_limit,
    )
    aliases = {0: 0} if donate_x else {}
    out_shape = jax.ShapeDtypeStruct((S, BD), x.dtype)

    if not use_dropout:
        out2d = pl.pallas_call(
            functools.partial(_pe_add_kernel, batch=B),
            out_shape=out_shape,
            grid=grid,
            in_specs=[x_spec, pe_spec],
            out_specs=o_spec,
            compiler_params=cparams,
            input_output_aliases=aliases,
        )(x2d, pe2d)
        return out2d.reshape(S, B, D)

    # Training-mode path.
    if rng_key is None:
        rng_key = jax.random.PRNGKey(0)
    # TODO(synk): cannot reproduce torch's dropout RNG stream; mask bits come from
    # jax.random (not the on-chip pltpu PRNG, which lacks an interpret-mode
    # lowering) — distributionally equivalent inverted dropout.
    bits = jax.random.bits(rng_key, (S, BD), dtype=jnp.uint32)
    threshold = min(int(round(float(dropout_p) * 2.0 ** 32)), (1 << 32) - 1)
    scale = 1.0 / (1.0 - float(dropout_p))

    out2d = pl.pallas_call(
        functools.partial(
            _pe_add_dropout_kernel, batch=B, threshold=threshold, scale=scale
        ),
        out_shape=out_shape,
        grid=grid,
        in_specs=[x_spec, pe_spec, pl.BlockSpec((tS, BD), lambda i: (i, 0))],
        out_specs=o_spec,
        compiler_params=cparams,
        input_output_aliases=aliases,
    )(x2d, pe2d, bits)
    return out2d.reshape(S, B, D)


# ---------------------------------------------------------------------------
# Self-test
# ---------------------------------------------------------------------------
if __name__ == "__main__":
    d_model = 32
    max_len = 64
    seq_len = 8
    batch = 2
    p = 0.1

    key = jax.random.PRNGKey(0)
    kx, kd = jax.random.split(key)
    x = jax.random.normal(kx, (seq_len, batch, d_model), dtype=jnp.float32)
    pe = make_positional_encoding_table(d_model, max_len)

    # Pure-JAX reference (computed up front).
    ref = x + pe[:seq_len]

    # Eval-mode forward (dropout is identity, like module.eval() in torch).
    out = positional_encoding_forward(x, pe, dropout_p=p, training=False)
    out = jax.block_until_ready(out)
    assert out.shape == (seq_len, batch, d_model)
    assert jnp.allclose(out, ref, atol=1e-6), "eval-mode mismatch vs reference"

    # Training-mode forward: every element must be 0 or ref/(1-p).
    out_train = positional_encoding_forward(
        x, pe, dropout_p=p, training=True, rng_key=kd
    )
    out_train = jax.block_until_ready(out_train)
    assert out_train.shape == (seq_len, batch, d_model)
    ok = jnp.isclose(out_train, 0.0) | jnp.isclose(out_train, ref / (1.0 - p), atol=1e-5)
    assert bool(jnp.all(ok)), "training-mode values not in {0, ref/(1-p)}"

    print("KERNEL_OK")
</pallas_src>

<mosaic_0001>
module attributes {stable_mosaic.version = 11 : i64} {
  func.func @_pe_add_kernel(%arg0: i32, %arg1: memref<8x64xf32, #tpu.memory_space<vmem>>, %arg2: memref<8x32xf32, #tpu.memory_space<vmem>>, %arg3: memref<8x64xf32, #tpu.memory_space<vmem>>) attributes {dimension_semantics = [#tpu.dimension_semantics<parallel>], iteration_bounds = array<i64: 1>, scalar_prefetch = 0 : i64, scratch_operands = 0 : i64, tpu.core_type = #tpu.core_type<tc>, window_params = [{transform_indices = @transform_0, window_bounds = array<i64: 8, 64>}, {transform_indices = @transform_1, window_bounds = array<i64: 8, 32>}, {transform_indices = @transform_2, window_bounds = array<i64: 8, 64>}]} {
    %c0 = arith.constant 0 : index
    %c0_0 = arith.constant 0 : index
    %0 = vector.load %arg2[%c0, %c0_0] : memref<8x32xf32, #tpu.memory_space<vmem>>, vector<8x32xf32>
    %1 = tpu.concatenate %0, %0 in 1 : vector<8x32xf32>, vector<8x32xf32> -> vector<8x64xf32>
    %c0_1 = arith.constant 0 : index
    %c0_2 = arith.constant 0 : index
    %2 = vector.load %arg1[%c0_1, %c0_2] : memref<8x64xf32, #tpu.memory_space<vmem>>, vector<8x64xf32>
    %3 = arith.addf %2, %1 : vector<8x64xf32>
    %c0_3 = arith.constant 0 : index
    %c0_4 = arith.constant 0 : index
    %4 = vector.load %arg3[%c0_3, %c0_4] : memref<8x64xf32, #tpu.memory_space<vmem>>, vector<8x64xf32>
    tpu.vector_store %arg3[%c0_3, %c0_4], %3 {strides = array<i32>} : memref<8x64xf32, #tpu.memory_space<vmem>>, vector<8x64xf32>,
    return
  }
  func.func @transform_0(%arg0: i32) -> (i32, i32) {
    %c0_i32 = arith.constant 0 : i32
    %c0_i32_0 = arith.constant 0 : i32
    return %arg0, %c0_i32 : i32, i32
  }
  func.func @transform_1(%arg0: i32) -> (i32, i32) {
    %c0_i32 = arith.constant 0 : i32
    %c0_i32_0 = arith.constant 0 : i32
    return %arg0, %c0_i32 : i32, i32
  }
  func.func @transform_2(%arg0: i32) -> (i32, i32) {
    %c0_i32 = arith.constant 0 : i32
    %c0_i32_0 = arith.constant 0 : i32
    return %arg0, %c0_i32 : i32, i32
  }
}

</mosaic_0001>

<llo_original>
// kernel: tpu_custom_call.1
$region0: #{tpu_custom_call.1}
  #allocation0 [shape = 'u32[]', space=smem, size = 0x4, offset = 0x4, fixed_abs, tag = 'smem constant byte address 0x4 - core index']
  #allocation1 [shape = 'u32[144,128]{1,0:T(1,128)}', space=vmem, size = 0x12000, scoped, tag = 'internal scratch']
  %s0 = inlined_call_operand.hbm [shape: f32[8,64], index: 0, kind: input, shape index: {}]
  %s1 = inlined_call_operand.hbm [shape: f32[8,32], index: 1, kind: input, shape index: {}]
  %s2 = inlined_call_operand.hbm [shape: f32[8,64], index: 2, kind: output, shape index: {}]
  %s3 = sld [smem:[#allocation0]]
  $region26: #{tpu_custom_call.1} parent=0
    _
  %s5 = ssub.s32 1, %s3
  %s6 = scalar_select 0, %s5, %s3
  $region1: #{tpu_custom_call.1} parent=0
    #allocation2 [shape = 'u8[4096]{0}', space=vmem, size = 0x1000, scoped, tag = 'input window, operand 0, single buffered']
    #allocation3 [shape = 's32[1]{0}', space=sflag, size = 0x4, scoped, tag = 'scoped memory for tpu_custom_call.1']
    #allocation4 [shape = 's32[1]{0}', space=sflag, size = 0x4, scoped, tag = 'scoped memory for tpu_custom_call.1']
    #allocation5 [shape = 'u8[4096]{0}', space=vmem, size = 0x1000, scoped, tag = 'input window, operand 1, single buffered']
    #allocation6 [shape = 's32[1]{0}', space=sflag, size = 0x4, scoped, tag = 'scoped memory for tpu_custom_call.1']
    #allocation7 [shape = 'u8[4096]{0}', space=vmem, size = 0x1000, scoped, tag = 'output window, operand 0, single buffered']
    %7 = vsyncpa [#allocation3], 0
    %8 = vsyncpa [#allocation6], 0
    %9 = vsyncpa [#allocation4], 0
    // Predicated region
    $region2: #{tpu_custom_call.1} parent=1 // pred_check
      _
    $region3: #{tpu_custom_call.1} parent=1 // pred_check_branch
      %11 = sbr.rel (0) target = $region5
    $region4: #{tpu_custom_call.1} parent=1 // pred_region
      %s13 = ssub.s32 128, 128
      %14 = vsyncadd [#allocation3], %s13
      %s16 = sshll.u32 [#allocation2], 4
      %s17 = int_to_ptr.vmem [resolvable:$true] %s16
      %19 = dma.hbm_to_vmem [thread:$0]  %s0, 128, %s17, [#allocation3]
    $region5: #{tpu_custom_call.1} parent=1 // pred_fallthru
      _
    // Predicated region
    $region6: #{tpu_custom_call.1} parent=1 // pred_check
      _
    $region7: #{tpu_custom_call.1} parent=1 // pred_check_branch
      %21 = sbr.rel (0) target = $region9
    $region8: #{tpu_custom_call.1} parent=1 // pred_region
      %s23 = ssub.s32 128, 128
      %24 = vsyncadd [#allocation6], %s23
      %s26 = sshll.u32 [#allocation5], 4
      %s27 = int_to_ptr.vmem [resolvable:$true] %s26
      %29 = dma.hbm_to_vmem [thread:$0]  %s1, 128, %s27, [#allocation6]
    $region9: #{tpu_custom_call.1} parent=1 // pred_fallthru
      _
    // Predicated region
    $region10: #{tpu_custom_call.1} parent=1 // pred_check
      _
    $region11: #{tpu_custom_call.1} parent=1 // pred_check_branch
      %31 = sbr.rel (0) target = $region13
    $region12: #{tpu_custom_call.1} parent=1 // pred_region
      %32 = dma.done [#allocation3], 128
    $region13: #{tpu_custom_call.1} parent=1 // pred_fallthru
      _
    // Predicated region
    $region14: #{tpu_custom_call.1} parent=1 // pred_check
      _
    $region15: #{tpu_custom_call.1} parent=1 // pred_check_branch
      %34 = sbr.rel (0) target = $region17
    $region16: #{tpu_custom_call.1} parent=1 // pred_region
      %35 = dma.done [#allocation6], 128
    $region17: #{tpu_custom_call.1} parent=1 // pred_fallthru
      _
    %v36 = vld [vmem:[#allocation5] sm:$0xff]
    %38 = vrot.lane.b32.xlu0 %v36, 32
    %v39 = vpop.permute.xlu0 %38
    %vm41 = vcmask 261120
    %v42 = vsel %vm41, %v36, %v39
    %v43 = vld [vmem:[#allocation2] sm:$0xff]
    %v44 = vadd.f32 %v43, %v42
    %vm45 = vcmask 523264
    %46 = vst.msk [vmem:[#allocation7] sm:$0xff] %vm45, %v44
    // Predicated region
    $region18: #{tpu_custom_call.1} parent=1 // pred_check
      _
    $region19: #{tpu_custom_call.1} parent=1 // pred_check_branch
      %48 = sbr.rel (0) target = $region21
    $region20: #{tpu_custom_call.1} parent=1 // pred_region
      %s50 = ssub.s32 128, 128
      %51 = vsyncadd [#allocation4], %s50
      %s53 = sshll.u32 [#allocation7], 4
      %s54 = int_to_ptr.vmem [resolvable:$true] %s53
      %56 = dma.vmem_to_hbm [thread:$0]  %s54, 128, %s2, [#allocation4]
    $region21: #{tpu_custom_call.1} parent=1 // pred_fallthru
      _
    // Predicated region
    $region22: #{tpu_custom_call.1} parent=1 // pred_check
      _
    $region23: #{tpu_custom_call.1} parent=1 // pred_check_branch
      %58 = sbr.rel (0) target = $region25
    $region24: #{tpu_custom_call.1} parent=1 // pred_region
      %59 = dma.done [#allocation4], 128
    $region25: #{tpu_custom_call.1} parent=1 // pred_fallthru
      _
    %60 = vsyncpa [#allocation3], 1
    %61 = vsyncpa [#allocation6], 1
    %62 = vsyncpa [#allocation4], 1

</llo_original>
